<compile_context>
chip_gen: v7x
topology: tpu7x:2x2x1
jax: 0.10.0
libtpu: 0.0.40
codegen_flags: <defaults>
</compile_context>

<pallas_src>
import jax
import jax.numpy as jnp
from jax.experimental import pallas as pl
from jax.experimental.pallas import tpu as pltpu

EMB_SIZE = 30  # matches `emb_size = 30` in the reference file


def mf_forward_kernel(idx_ref, tab_ref, o_ref):
    # idx_ref : (2, TB) int32 — row 0 = user index, row 1 = NU + item index
    # tab_ref : (2*E_pad, NU+NI) f32 — fused block-diagonal transposed tables
    #           (VMEM-resident: constant index_map, fetched once)
    # o_ref   : (1, TB) f32 — lane-dense output block
    idx = idx_ref[...]                       # (2, TB)
    tab = tab_ref[...]                       # (2*E_pad, NC)

    nc = tab.shape[1]
    e_pad = tab.shape[0] // 2
    tb = idx.shape[1]

    # Combined one-hot "gather" matrix: C[r, b] = 1 iff r == user_idx[b]
    # or r == NU + item_idx[b] (the +NU shift was applied in the wrapper).
    r = jax.lax.broadcasted_iota(jnp.int32, (nc, tb), 0)
    c = (r == idx[0:1, :]) | (r == idx[1:2, :])

    # Single MXU matmul gathers both embeddings, stacked and transposed:
    #   g[:e_pad]  = user_emb[user]^T   (rows >= E are zero padding)
    #   g[e_pad:]  = item_emb[item]^T   (rows >= E are zero padding)
    g = jnp.dot(tab, c.astype(jnp.float32),
                preferred_element_type=jnp.float32)        # (2*E_pad, TB)

    # (u * i).sum over the embedding axis (sublane reduce) -> (1, TB).
    # Zero-padded rows contribute exactly 0.
    o_ref[...] = jnp.sum(g[:e_pad, :] * g[e_pad:, :], axis=0, keepdims=True)


def make_mf_forward(user_emb_w, item_emb_w, *, block_batch=1024):
    """Build a jitted MF.forward given fixed embedding weights.

    The fused/transposed/padded table is built once here (hoisted out of the
    per-call hot path).  The returned function maps (user, item) index vectors
    of shape (B,) to (B,) float32 scores == torch.mul(u, i).sum(-1).float().
    """
    NU, E = user_emb_w.shape
    NI, E2 = item_emb_w.shape
    assert E == E2
    E_pad = ((E + 7) // 8) * 8            # sublane-align the embedding axis
    NC = NU + NI

    # Fused block-diagonal transposed table, built once:
    #   rows [0:E)            , cols [0:NU)      -> user_emb^T
    #   rows [E_pad:E_pad+E)  , cols [NU:NU+NI)  -> item_emb^T
    tab = jnp.zeros((2 * E_pad, NC), jnp.float32)
    tab = tab.at[:E, :NU].set(user_emb_w.astype(jnp.float32).T)
    tab = tab.at[E_pad:E_pad + E, NU:].set(item_emb_w.astype(jnp.float32).T)

    def forward(user, item):
        B = user.shape[0]
        B_round = pl.cdiv(B, 128) * 128               # lane-dense batch padding
        TB = min(block_batch, B_round)
        # Keep >=2 independent grid blocks when the batch allows, so the
        # "parallel" batch axis can be sharded across v7x's two TensorCores.
        # (Extra trip costs only ~0.35 us on single-TC v5e/v6e.)
        if B_round >= 256 and B_round // TB < 2:
            TB = max(128, ((B_round // 2) // 128) * 128)
        nb = pl.cdiv(B_round, TB)
        B_pad = nb * TB

        # Single packed index array: row 0 = user idx, row 1 = NU + item idx.
        # One pad op (no zeros+scatter), one DMA per grid step.
        idx = jnp.stack([user.astype(jnp.int32),
                         item.astype(jnp.int32) + NU])        # (2, B)
        idx = jnp.pad(idx, ((0, 0), (0, B_pad - B)))          # (2, B_pad)

        out = pl.pallas_call(
            mf_forward_kernel,
            grid=(nb,),
            in_specs=[
                # packed indices for this block of examples
                pl.BlockSpec((2, TB), lambda b: (0, b)),
                # fused table, constant index_map -> VMEM-resident across steps
                pl.BlockSpec((2 * E_pad, NC), lambda b: (0, 0)),
            ],
            out_specs=pl.BlockSpec((1, TB), lambda b: (0, b)),
            out_shape=jax.ShapeDtypeStruct((1, B_pad), jnp.float32),
            compiler_params=pltpu.CompilerParams(
                dimension_semantics=("parallel",)),   # independent batch blocks
        )(idx, tab)

        return out.reshape(B_pad)[:B]                 # (B,) float32

    return jax.jit(forward)


def mf_forward(user, item, user_emb_w, item_emb_w, *, block_batch=1024):
    """Convenience one-shot wrapper (builds the fused table per call)."""
    return make_mf_forward(user_emb_w, item_emb_w,
                           block_batch=block_batch)(user, item)


def xavier_normal(key, shape):
    # nn.init.xavier_normal_ on an (num_embeddings, emb_dim) weight:
    # fan_out = shape[0], fan_in = shape[1], std = sqrt(2 / (fan_in + fan_out))
    fan_out, fan_in = shape
    std = (2.0 / (fan_in + fan_out)) ** 0.5
    return std * jax.random.normal(key, shape, dtype=jnp.float32)


if __name__ == "__main__":
    num_users, num_items, batch = 50, 40, 8

    key = jax.random.PRNGKey(0)
    k_u, k_i, k_uid, k_iid = jax.random.split(key, 4)

    # Deterministic synthetic parameters (shapes from MF.__init__).
    user_emb_w = xavier_normal(k_u, (num_users, EMB_SIZE))
    item_emb_w = xavier_normal(k_i, (num_items, EMB_SIZE))

    # Deterministic synthetic inputs (index tensors, as in the torch forward).
    user = jax.random.randint(k_uid, (batch,), 0, num_users, dtype=jnp.int32)
    item = jax.random.randint(k_iid, (batch,), 0, num_items, dtype=jnp.int32)

    fwd = make_mf_forward(user_emb_w, item_emb_w)   # table fusion hoisted here
    out = jax.block_until_ready(fwd(user, item))

    # Pure-JAX reference check of the forward semantics.
    ref = jnp.sum(user_emb_w[user] * item_emb_w[item], axis=-1).astype(jnp.float32)
    assert out.shape == (batch,) and out.dtype == jnp.float32
    assert jnp.allclose(out, ref, atol=1e-5, rtol=1e-5)

    print("KERNEL_OK")
</pallas_src>

<mosaic_0001>
module attributes {stable_mosaic.version = 11 : i64} {
  func.func @mf_forward_kernel(%arg0: i32, %arg1: memref<2x128xi32, #tpu.memory_space<vmem>>, %arg2: memref<64x90xf32, #tpu.memory_space<vmem>>, %arg3: memref<1x128xf32, #tpu.memory_space<vmem>>) attributes {dimension_semantics = [#tpu.dimension_semantics<parallel>], iteration_bounds = array<i64: 1>, scalar_prefetch = 0 : i64, scratch_operands = 0 : i64, tpu.core_type = #tpu.core_type<tc>, window_params = [{transform_indices = @transform_0, window_bounds = array<i64: 2, 128>}, {pipeline_mode = #tpu.pipeline_mode<synchronous>, transform_indices = @transform_1, window_bounds = array<i64: 64, 90>}, {transform_indices = @transform_2, window_bounds = array<i64: 1, 128>}]} {
    %c0 = arith.constant 0 : index
    %c0_0 = arith.constant 0 : index
    %0 = vector.load %arg1[%c0, %c0_0] : memref<2x128xi32, #tpu.memory_space<vmem>>, vector<2x128xi32>
    %c0_1 = arith.constant 0 : index
    %c0_2 = arith.constant 0 : index
    %1 = vector.load %arg2[%c0_1, %c0_2] : memref<64x90xf32, #tpu.memory_space<vmem>>, vector<64x90xf32>
    %2 = tpu.iota {dimensions = array<i32: 0>} : vector<90x128xi32>
    %3 = vector.extract_strided_slice %0 {offsets = [0, 0], sizes = [1, 128], strides = [1, 1]} : vector<2x128xi32> to vector<1x128xi32>
    %4 = vector.broadcast %3 : vector<1x128xi32> to vector<90x128xi32>
    %5 = arith.cmpi eq, %2, %4 : vector<90x128xi32>
    %6 = vector.extract_strided_slice %0 {offsets = [1, 0], sizes = [1, 128], strides = [1, 1]} : vector<2x128xi32> to vector<1x128xi32>
    %7 = vector.broadcast %6 : vector<1x128xi32> to vector<90x128xi32>
    %8 = arith.cmpi eq, %2, %7 : vector<90x128xi32>
    %9 = arith.ori %5, %8 : vector<90x128xi1>
    %10 = arith.extui %9 : vector<90x128xi1> to vector<90x128xi32>
    %11 = arith.sitofp %10 : vector<90x128xi32> to vector<90x128xf32>
    %cst = arith.constant dense<0.000000e+00> : vector<64x128xf32>
    %12 = tpu.matmul %1, %11, %cst {dimension_numbers = #tpu.dot_dimension_numbers<[1], [0], [0], [1], [0, 0, 1, 1], [], []>} : vector<64x90xf32>, vector<90x128xf32>, vector<64x128xf32> -> vector<64x128xf32>
    %13 = vector.extract_strided_slice %12 {offsets = [0, 0], sizes = [32, 128], strides = [1, 1]} : vector<64x128xf32> to vector<32x128xf32>
    %14 = vector.extract_strided_slice %12 {offsets = [32, 0], sizes = [32, 128], strides = [1, 1]} : vector<64x128xf32> to vector<32x128xf32>
    %15 = arith.mulf %13, %14 : vector<32x128xf32>
    %cst_3 = arith.constant dense<0.000000e+00> : vector<128xf32>
    %16 = vector.multi_reduction <add>, %15, %cst_3 [0] : vector<32x128xf32> to vector<128xf32>
    %17 = vector.shape_cast %16 : vector<128xf32> to vector<1x128xf32>
    %c0_4 = arith.constant 0 : index
    %c0_5 = arith.constant 0 : index
    %18 = vector.load %arg3[%c0_4, %c0_5] : memref<1x128xf32, #tpu.memory_space<vmem>>, vector<1x128xf32>
    tpu.vector_store %arg3[%c0_4, %c0_5], %17 {strides = array<i32>} : memref<1x128xf32, #tpu.memory_space<vmem>>, vector<1x128xf32>,
    return
  }
  func.func @transform_0(%arg0: i32) -> (i32, i32) {
    %c0_i32 = arith.constant 0 : i32
    %c0_i32_0 = arith.constant 0 : i32
    return %c0_i32, %arg0 : i32, i32
  }
  func.func @transform_1(%arg0: i32) -> (i32, i32) {
    %c0_i32 = arith.constant 0 : i32
    %c0_i32_0 = arith.constant 0 : i32
    %c0_i32_1 = arith.constant 0 : i32
    return %c0_i32, %c0_i32_0 : i32, i32
  }
  func.func @transform_2(%arg0: i32) -> (i32, i32) {
    %c0_i32 = arith.constant 0 : i32
    %c0_i32_0 = arith.constant 0 : i32
    return %c0_i32, %arg0 : i32, i32
  }
}

</mosaic_0001>

<llo_original>
// kernel: forward.1
$region0: #{forward.1}
  #allocation0 [shape = 'u32[]', space=smem, size = 0x4, offset = 0x4, fixed_abs, tag = 'smem constant byte address 0x4 - core index']
  #allocation1 [shape = 'u32[144,128]{1,0:T(1,128)}', space=vmem, size = 0x12000, scoped, tag = 'internal scratch']
  %s0 = inlined_call_operand.vmem [shape: s32[2,128], index: 0, kind: input, shape index: {}]
  %s1 = inlined_call_operand.hbm [shape: f32[64,90], index: 1, kind: input, shape index: {}]
  %s2 = inlined_call_operand.vmem [shape: f32[1,128], index: 2, kind: output, shape index: {}]
  %s3 = sld [smem:[#allocation0]]
  $region22: #{forward.1} parent=0
    _
  %s5 = ssub.s32 1, %s3
  %s6 = scalar_select 0, %s5, %s3
  $region1: #{forward.1} parent=0
    #allocation2 [shape = 'u8[32768]{0}', space=vmem, size = 0x8000, scoped, tag = 'input window, operand 1, single buffered']
    #allocation3 [shape = 's32[1]{0}', space=sflag, size = 0x4, scoped, tag = 'scoped memory for forward.1']
    %7 = vsyncpa [#allocation3], 0
    // Predicated region
    $region2: #{forward.1} parent=1 // pred_check
      _
    $region3: #{forward.1} parent=1 // pred_check_branch
      %9 = sbr.rel (0) target = $region5
    $region4: #{forward.1} parent=1 // pred_region
      _
    $region5: #{forward.1} parent=1 // pred_fallthru
      _
    // Predicated region
    $region6: #{forward.1} parent=1 // pred_check
      _
    $region7: #{forward.1} parent=1 // pred_check_branch
      %11 = sbr.rel (0) target = $region9
    $region8: #{forward.1} parent=1 // pred_region
      %s13 = ssub.s32 1024, 1024
      %14 = vsyncadd [#allocation3], %s13
      %s15 = sshll.u32 [#allocation2], 4
      %s16 = int_to_ptr.vmem [resolvable:$true] %s15
      %21 = dma.hbm_to_vmem [thread:$0]  %s1, 1024, %s16, [#allocation3], 128, 128, 8
    $region9: #{forward.1} parent=1 // pred_fallthru
      _
    // Predicated region
    $region10: #{forward.1} parent=1 // pred_check
      _
    $region11: #{forward.1} parent=1 // pred_check_branch
      %23 = sbr.rel (0) target = $region13
    $region12: #{forward.1} parent=1 // pred_region
      %24 = dma.done [#allocation3], 1024
    $region13: #{forward.1} parent=1 // pred_fallthru
      _
    %v25 = vld [vmem:[%s0] sm:$0x3]
    %v26 = vld [vmem:[#allocation2] sm:$0xff]
    %v27 = vld [vmem:[#allocation2 + $0x8] sm:$0xff]
    %v28 = vld [vmem:[#allocation2 + $0x10] sm:$0xff]
    %v29 = vld [vmem:[#allocation2 + $0x18] sm:$0xff]
    %v30 = vld [vmem:[#allocation2 + $0x20] sm:$0xff]
    %v31 = vld [vmem:[#allocation2 + $0x28] sm:$0xff]
    %v32 = vld [vmem:[#allocation2 + $0x30] sm:$0xff]
    %v33 = vld [vmem:[#allocation2 + $0x38] sm:$0xff]
    %v34 = vlaneseq
    %v35 = vshrl.u32 %v34, 7
    %v36 = vadd.s32 %v35, 8
    %v37 = vadd.s32 %v35, 16
    %v38 = vadd.s32 %v35, 24
    %v39 = vadd.s32 %v35, 32
    %v40 = vadd.s32 %v35, 40
    %v41 = vadd.s32 %v35, 48
    %v42 = vadd.s32 %v35, 56
    %v43 = vadd.s32 %v35, 64
    %v44 = vadd.s32 %v35, 72
    %v45 = vadd.s32 %v35, 80
    %v46 = vadd.s32 %v35, 88
    %v47 = vlaneseq
    %v48 = vshrl.u32 %v47, 7
    %v49 = vsub.s32 0, %v48
    %v50 = vrot.slane %v25, %v49
    %vm51 = vcmp.eq.s32.totalorder %v35, %v50
    %vm52 = vcmp.eq.s32.totalorder %v36, %v50
    %vm53 = vcmp.eq.s32.totalorder %v37, %v50
    %vm54 = vcmp.eq.s32.totalorder %v38, %v50
    %vm55 = vcmp.eq.s32.totalorder %v39, %v50
    %vm56 = vcmp.eq.s32.totalorder %v40, %v50
    %vm57 = vcmp.eq.s32.totalorder %v41, %v50
    %vm58 = vcmp.eq.s32.totalorder %v42, %v50
    %vm59 = vcmp.eq.s32.totalorder %v43, %v50
    %vm60 = vcmp.eq.s32.totalorder %v44, %v50
    %vm61 = vcmp.eq.s32.totalorder %v45, %v50
    %vm62 = vcmp.eq.s32.totalorder %v46, %v50
    %v63 = vlaneseq
    %v64 = vshrl.u32 %v63, 7
    %v65 = vsub.s32 1, %v64
    %v66 = vrot.slane %v25, %v65
    %vm67 = vcmp.eq.s32.totalorder %v35, %v66
    %vm68 = vcmp.eq.s32.totalorder %v36, %v66
    %vm69 = vcmp.eq.s32.totalorder %v37, %v66
    %vm70 = vcmp.eq.s32.totalorder %v38, %v66
    %vm71 = vcmp.eq.s32.totalorder %v39, %v66
    %vm72 = vcmp.eq.s32.totalorder %v40, %v66
    %vm73 = vcmp.eq.s32.totalorder %v41, %v66
    %vm74 = vcmp.eq.s32.totalorder %v42, %v66
    %vm75 = vcmp.eq.s32.totalorder %v43, %v66
    %vm76 = vcmp.eq.s32.totalorder %v44, %v66
    %vm77 = vcmp.eq.s32.totalorder %v45, %v66
    %vm78 = vcmp.eq.s32.totalorder %v46, %v66
    %vm79 = vmor %vm51, %vm67
    %vm80 = vmor %vm52, %vm68
    %vm81 = vmor %vm53, %vm69
    %vm82 = vmor %vm54, %vm70
    %vm83 = vmor %vm55, %vm71
    %vm84 = vmor %vm56, %vm72
    %vm85 = vmor %vm57, %vm73
    %vm86 = vmor %vm58, %vm74
    %vm87 = vmor %vm59, %vm75
    %vm88 = vmor %vm60, %vm76
    %vm89 = vmor %vm61, %vm77
    %vm90 = vmor %vm62, %vm78
    %v91 = vsel %vm79, 1, 0
    %v92 = vsel %vm80, 1, 0
    %v93 = vsel %vm81, 1, 0
    %v94 = vsel %vm82, 1, 0
    %v95 = vsel %vm83, 1, 0
    %v96 = vsel %vm84, 1, 0
    %v97 = vsel %vm85, 1, 0
    %v98 = vsel %vm86, 1, 0
    %v99 = vsel %vm87, 1, 0
    %v100 = vsel %vm88, 1, 0
    %v101 = vsel %vm89, 1, 0
    %v102 = vsel %vm90, 1, 0
    %v103 = vcvt.s32.f32 %v91
    %v104 = vcvt.s32.f32 %v92
    %v105 = vcvt.s32.f32 %v93
    %v106 = vcvt.s32.f32 %v94
    %v107 = vcvt.s32.f32 %v95
    %v108 = vcvt.s32.f32 %v96
    %v109 = vcvt.s32.f32 %v97
    %v110 = vcvt.s32.f32 %v98
    %v111 = vcvt.s32.f32 %v99
    %v112 = vcvt.s32.f32 %v100
    %v113 = vcvt.s32.f32 %v101
    %v114 = vcvt.s32.f32 %v102
    %vm115 = vcmask 736256
    %v117 = vsel %vm115, %v26, 0
    %v120 = vsel %vm115, %v27, 0
    %v123 = vsel %vm115, %v28, 0
    %v126 = vsel %vm115, %v29, 0
    %v129 = vsel %vm115, %v30, 0
    %v132 = vsel %vm115, %v31, 0
    %v135 = vsel %vm115, %v32, 0
    %v138 = vsel %vm115, %v33, 0
    %vm140 = vcmask 1041408
    %v142 = vsel %vm140, %v114, 0
    %144 = vmatprep.subr.mxu0 0.0
    %145 = vmatpush1.msra.mxu0 %v103
    %146 = vmatprep.subr.mxu0 0.0
    %147 = vmatpush1.msra.mxu0 %v104
    %148 = vmatprep.subr.mxu0 0.0
    %149 = vmatpush1.msra.mxu0 %v105
    %150 = vmatprep.subr.mxu0 0.0
    %151 = vmatpush1.msra.mxu0 %v106
    %152 = vmatprep.subr.mxu0 0.0
    %153 = vmatpush1.msra.mxu0 %v107
    %154 = vmatprep.subr.mxu0 0.0
    %155 = vmatpush1.msra.mxu0 %v108
    %156 = vmatprep.subr.mxu0 0.0
    %157 = vmatpush1.msra.mxu0 %v109
    %158 = vmatprep.subr.mxu0 0.0
    %159 = vmatpush1.msra.mxu0 %v110
    %160 = vmatprep.subr.mxu0 0.0
    %161 = vmatpush1.msra.mxu0 %v111
    %162 = vmatprep.subr.mxu0 0.0
    %163 = vmatpush1.msra.mxu0 %v112
    %164 = vmatprep.subr.mxu0 0.0
    %165 = vmatpush1.msra.mxu0 %v113
    %166 = vmatprep.subr.mxu0 0.0
    %167 = vmatpush1.msra.mxu0 %v142
    %168 = vmatprep.subr.mxu0 0.0
    %169 = vmatpush1.msra.mxu0 0.0
    %170 = vmatprep.subr.mxu0 0.0
    %171 = vmatpush1.msra.mxu0 0.0
    %172 = vmatprep.subr.mxu0 0.0
    %173 = vmatpush1.msra.mxu0 0.0
    %174 = vmatprep.subr.mxu0 0.0
    %175 = vmatpush1.msra.mxu0 0.0
    %176 = vmatprep.subr.mxu0 0.0
    %177 = vmatpush1.msra.mxu0 0.0
    %178 = vmatprep.subr.mxu0 0.0
    %179 = vmatpush1.msra.mxu0 0.0
    %180 = vmatprep.subr.mxu0 0.0
    %181 = vmatpush1.msra.mxu0 0.0
    %182 = vmatprep.subr.mxu0 0.0
    %183 = vmatpush1.msra.mxu0 0.0
    %184 = vmatprep.subr.mxu0 0.0
    %185 = vmatpush1.msra.mxu0 0.0
    %186 = vmatprep.subr.mxu0 0.0
    %187 = vmatpush1.msra.mxu0 0.0
    %188 = vmatprep.subr.mxu0 0.0
    %189 = vmatpush1.msra.mxu0 0.0
    %190 = vmatprep.subr.mxu0 0.0
    %191 = vmatpush1.msra.mxu0 0.0
    %192 = vmatprep.subr.mxu0 0.0
    %193 = vmatpush1.msra.mxu0 0.0
    %194 = vmatprep.subr.mxu0 0.0
    %195 = vmatpush1.msra.mxu0 0.0
    %196 = vmatprep.subr.mxu0 0.0
    %197 = vmatpush1.msra.mxu0 0.0
    %198 = vmatprep.subr.mxu0 0.0
    %199 = vmatpush1.msra.mxu0 0.0
    %200 = vmatprep.subr.mxu0 0.0
    %201 = vmatpush1.msra.mxu0 0.0
    %202 = vmatprep.subr.mxu0 0.0
    %203 = vmatpush1.msra.mxu0 0.0
    %204 = vmatprep.subr.mxu0 0.0
    %205 = vmatpush1.msra.mxu0 0.0
    %206 = vmatprep.subr.mxu0 0.0
    %207 = vmatpush1.msra.mxu0 0.0
    %208 = vmatprep.mubr.f32.mxu0 0.0
    %209 = vmatmul.mubr.f32.gmra.mrb[0].mxu0 %v117
    %v210 = vpop.f32.mrb[0].mxu0
    %v211 = vadd.f32 0.0, %v210
    %v212 = vpop.f32.mrb[0].mxu0
    %213 = vmatprep.mubr.f32.mxu0 0.0
    %214 = vmatmul.mubr.f32.gmra.mrb[0].mxu0 %v120
    %v215 = vpop.f32.mrb[0].mxu0
    %v216 = vadd.f32 0.0, %v215
    %v217 = vpop.f32.mrb[0].mxu0
    %218 = vmatprep.mubr.f32.mxu0 0.0
    %219 = vmatmul.mubr.f32.gmra.mrb[0].mxu0 %v123
    %v220 = vpop.f32.mrb[0].mxu0
    %v221 = vadd.f32 0.0, %v220
    %v222 = vpop.f32.mrb[0].mxu0
    %223 = vmatprep.mubr.f32.mxu0 0.0
    %224 = vmatmul.mubr.f32.gmra.mrb[0].mxu0 %v126
    %v225 = vpop.f32.mrb[0].mxu0
    %v226 = vadd.f32 0.0, %v225
    %v227 = vpop.f32.mrb[0].mxu0
    %228 = vmatprep.mubr.f32.mxu0 0.0
    %229 = vmatmul.mubr.f32.gmra.mrb[0].mxu0 %v129
    %v230 = vpop.f32.mrb[0].mxu0
    %v231 = vadd.f32 0.0, %v230
    %v232 = vpop.f32.mrb[0].mxu0
    %233 = vmatprep.mubr.f32.mxu0 0.0
    %234 = vmatmul.mubr.f32.gmra.mrb[0].mxu0 %v132
    %v235 = vpop.f32.mrb[0].mxu0
    %v236 = vadd.f32 0.0, %v235
    %v237 = vpop.f32.mrb[0].mxu0
    %238 = vmatprep.mubr.f32.mxu0 0.0
    %239 = vmatmul.mubr.f32.gmra.mrb[0].mxu0 %v135
    %v240 = vpop.f32.mrb[0].mxu0
    %v241 = vadd.f32 0.0, %v240
    %v242 = vpop.f32.mrb[0].mxu0
    %243 = vmatprep.mubr.f32.mxu0 0.0
    %244 = vmatmul.mubr.f32.gmra.mrb[0].mxu0 %v138
    %v245 = vpop.f32.mrb[0].mxu0
    %v246 = vadd.f32 0.0, %v245
    %v247 = vpop.f32.mrb[0].mxu0
    %248 = vdwg.mxu0
    %v249 = vmul.f32 %v211, %v231
    %v250 = vmul.f32 %v216, %v236
    %v251 = vmul.f32 %v221, %v241
    %v252 = vmul.f32 %v226, %v246
    %v253 = vadd.f32 %v249, %v250
    %v254 = vadd.f32 %v253, %v251
    %v255 = vadd.f32 %v254, %v252
    %v256 = vrot.slane %v255, 4
    %v257 = vadd.f32 %v255, %v256
    %v258 = vrot.slane %v257, 2
    %v259 = vadd.f32 %v257, %v258
    %v260 = vrot.slane %v259, 1
    %v261 = vadd.f32 %v259, %v260
    %262 = vst [vmem:[%s2] sm:$0x1] %v261
    // Predicated region
    $region14: #{forward.1} parent=1 // pred_check
      _
    $region15: #{forward.1} parent=1 // pred_check_branch
      %264 = sbr.rel (0) target = $region17
    $region16: #{forward.1} parent=1 // pred_region
      _
    $region17: #{forward.1} parent=1 // pred_fallthru
      _
    // Predicated region
    $region18: #{forward.1} parent=1 // pred_check
      _
    $region19: #{forward.1} parent=1 // pred_check_branch
      %266 = sbr.rel (0) target = $region21
    $region20: #{forward.1} parent=1 // pred_region
      _
    $region21: #{forward.1} parent=1 // pred_fallthru
      _
    %267 = vsyncpa [#allocation3], 1

</llo_original>
